<compile_context>
chip_gen: v5e
topology: v5e:2x2
jax: 0.10.0
libtpu: 0.0.40
codegen_flags: <defaults>
</compile_context>

<pallas_src>
import math
import jax
import jax.numpy as jnp
from jax import lax
from jax.experimental import pallas as pl
from jax.experimental.pallas import tpu as pltpu

# ---------------- config (small, consistent with the module) ----------------
BATCH = 2
SEQ = 8
HIDDEN = 32
NUM_HEADS = 4
HEAD_SIZE = HIDDEN // NUM_HEADS          # 8
SCALE = 1.0 / math.sqrt(HEAD_SIZE)


# ---------------------------------------------------------------------------
# Per-(batch, head) kernel: QKV projection for ONE head + attention.
#   x_ref: (S, H)     hidden states for this batch row
#   w_ref: (3, H, D)  [Wq*scale | Wk | Wv] for this head (head split by BlockSpec)
#   b_ref: (3, 1, D)  [bq*scale | bk | bv]
#   o_ref: (S, D)     per-head context tile
# No in-kernel slices / stacks / concats: all tiling is BlockSpec-driven.
# ---------------------------------------------------------------------------
def _head_attention_kernel(x_ref, w_ref, b_ref, o_ref):
    x = x_ref[...]                                                    # (S, H)

    q = jnp.dot(x, w_ref[0], preferred_element_type=jnp.float32) + b_ref[0]
    k = jnp.dot(x, w_ref[1], preferred_element_type=jnp.float32) + b_ref[1]
    v = jnp.dot(x, w_ref[2], preferred_element_type=jnp.float32) + b_ref[2]

    # Scores: contract the last (D) axes directly -- no materialized k.T.
    # 1/sqrt(D) is already folded into q (weights + bias), so no scale here.
    scores = lax.dot_general(q, k, (((1,), (1,)), ((), ())),
                             preferred_element_type=jnp.float32)      # (S, S)

    # Numerically-stable softmax over keys; reciprocal on the EUP slot.
    m = jnp.max(scores, axis=-1, keepdims=True)
    e = jnp.exp(scores - m)
    probs = e * pl.reciprocal(jnp.sum(e, axis=-1, keepdims=True), approx=True)
    # dropout is identity in eval mode

    o_ref[...] = jnp.dot(probs, v, preferred_element_type=jnp.float32)  # (S, D)


def linformer_self_attention(hidden_states, w_qkv, b_qkv):
    b, s, h = hidden_states.shape
    nh, d = NUM_HEADS, HEAD_SIZE

    out = pl.pallas_call(
        _head_attention_kernel,
        out_shape=jax.ShapeDtypeStruct((b, nh, s, d), jnp.float32),
        grid=(b, nh),
        in_specs=[
            pl.BlockSpec((None, s, h), lambda bi, hi: (bi, 0, 0)),      # x
            pl.BlockSpec((3, None, h, d), lambda bi, hi: (0, hi, 0, 0)),  # w
            pl.BlockSpec((3, None, 1, d), lambda bi, hi: (0, hi, 0, 0)),  # bias
        ],
        out_specs=pl.BlockSpec((None, None, s, d),
                               lambda bi, hi: (bi, hi, 0, 0)),
        compiler_params=pltpu.CompilerParams(
            dimension_semantics=("parallel", "parallel")),
    )(hidden_states, w_qkv, b_qkv)

    # Head merge == PyTorch permute(0, 2, 1, 3).contiguous().view(B, S, H).
    return out.transpose(0, 2, 1, 3).reshape(b, s, h)


def fuse_qkv_params(params):
    """One-time weight prep.

    Lays the fused QKV weights out as (3, NH, H, D) / biases as (3, NH, 1, D)
    so the per-head split happens in BlockSpec index_maps (leading dims only,
    no lane slicing in-kernel), and folds 1/sqrt(D) into Wq AND bq.
    """
    def per_head_w(w):          # (H, NH*D) -> (NH, H, D)
        return w.reshape(HIDDEN, NUM_HEADS, HEAD_SIZE).transpose(1, 0, 2)

    def per_head_b(bias):       # (1, NH*D) -> (NH, 1, D)
        return bias.reshape(NUM_HEADS, HEAD_SIZE)[:, None, :]

    w_qkv = jnp.stack([per_head_w(params["wq"] * SCALE),
                       per_head_w(params["wk"]),
                       per_head_w(params["wv"])], axis=0)   # (3, NH, H, D)
    b_qkv = jnp.stack([per_head_b(params["bq"] * SCALE),
                       per_head_b(params["bk"]),
                       per_head_b(params["bv"])], axis=0)   # (3, NH, 1, D)
    return w_qkv, b_qkv


# ---------------------------------------------------------------------------
# Pure-JAX reference for verification (uses the original separate weights).
# ---------------------------------------------------------------------------
def reference(hidden_states, params):
    b, s, h = hidden_states.shape
    q = hidden_states @ params["wq"] + params["bq"][0]
    k = hidden_states @ params["wk"] + params["bk"][0]
    v = hidden_states @ params["wv"] + params["bv"][0]

    def split(t):
        return t.reshape(b, s, NUM_HEADS, HEAD_SIZE).transpose(0, 2, 1, 3)

    q, k, v = split(q), split(k), split(v)
    scores = jnp.einsum("bhld,bhrd->bhlr", q, k) / math.sqrt(HEAD_SIZE)
    probs = jax.nn.softmax(scores, axis=-1)
    ctx = jnp.einsum("bhlr,bhrd->bhld", probs, v)
    return ctx.transpose(0, 2, 1, 3).reshape(b, s, h)


if __name__ == "__main__":
    key = jax.random.PRNGKey(0)
    kx, kq, kk, kv, kbq, kbk, kbv = jax.random.split(key, 7)

    # Deterministic synthetic parameters (nn.Linear(H, H) weights/biases).
    # Weights stored as (in, out) so y = x @ W + b (== x @ W_pt.T + b_pt).
    bound = 1.0 / math.sqrt(HIDDEN)
    params = {
        "wq": jax.random.uniform(kq, (HIDDEN, HIDDEN), jnp.float32, -bound, bound),
        "wk": jax.random.uniform(kk, (HIDDEN, HIDDEN), jnp.float32, -bound, bound),
        "wv": jax.random.uniform(kv, (HIDDEN, HIDDEN), jnp.float32, -bound, bound),
        "bq": jax.random.uniform(kbq, (1, HIDDEN), jnp.float32, -bound, bound),
        "bk": jax.random.uniform(kbk, (1, HIDDEN), jnp.float32, -bound, bound),
        "bv": jax.random.uniform(kbv, (1, HIDDEN), jnp.float32, -bound, bound),
    }

    hidden_states = jax.random.normal(kx, (BATCH, SEQ, HIDDEN), jnp.float32)

    # One-time parameter fusion (normally folded into weight loading).
    w_qkv, b_qkv = fuse_qkv_params(params)

    out = linformer_self_attention(hidden_states, w_qkv, b_qkv)
    out = jax.block_until_ready(out)

    ref = reference(hidden_states, params)
    assert out.shape == (BATCH, SEQ, HIDDEN)
    # rtol accounts for the EUP approximate reciprocal in the softmax
    # normalization (purely multiplicative per-row error, well under 1%).
    assert jnp.allclose(out, ref, rtol=1e-2, atol=1e-4), "mismatch vs reference"

    print("KERNEL_OK")
</pallas_src>

<mosaic_0001>
module attributes {stable_mosaic.version = 11 : i64} {
  func.func @_head_attention_kernel(%arg0: i32, %arg1: i32, %arg2: memref<1x8x32xf32, #tpu.memory_space<vmem>>, %arg3: memref<3x1x32x8xf32, #tpu.memory_space<vmem>>, %arg4: memref<3x1x1x8xf32, #tpu.memory_space<vmem>>, %arg5: memref<1x1x8x8xf32, #tpu.memory_space<vmem>>) attributes {dimension_semantics = [#tpu.dimension_semantics<parallel>, #tpu.dimension_semantics<parallel>], iteration_bounds = array<i64: 2, 4>, scalar_prefetch = 0 : i64, scratch_operands = 0 : i64, tpu.core_type = #tpu.core_type<tc>, window_params = [{transform_indices = @transform_0, window_bounds = array<i64: 1, 8, 32>}, {transform_indices = @transform_1, window_bounds = array<i64: 3, 1, 32, 8>}, {transform_indices = @transform_2, window_bounds = array<i64: 3, 1, 1, 8>}, {transform_indices = @transform_3, window_bounds = array<i64: 1, 1, 8, 8>}]} {
    %c0 = arith.constant 0 : index
    %c0_0 = arith.constant 0 : index
    %c0_1 = arith.constant 0 : index
    %0 = vector.load %arg2[%c0, %c0_0, %c0_1] : memref<1x8x32xf32, #tpu.memory_space<vmem>>, vector<1x8x32xf32>
    %1 = vector.shape_cast %0 : vector<1x8x32xf32> to vector<8x32xf32>
    %c0_2 = arith.constant 0 : index
    %c0_3 = arith.constant 0 : index
    %c0_4 = arith.constant 0 : index
    %c0_5 = arith.constant 0 : index
    %2 = vector.load %arg3[%c0_2, %c0_3, %c0_4, %c0_5] : memref<3x1x32x8xf32, #tpu.memory_space<vmem>>, vector<1x1x32x8xf32>
    %3 = vector.shape_cast %2 : vector<1x1x32x8xf32> to vector<32x8xf32>
    %cst = arith.constant dense<0.000000e+00> : vector<8x8xf32>
    %4 = tpu.matmul %1, %3, %cst {dimension_numbers = #tpu.dot_dimension_numbers<[1], [0], [0], [1], [0, 0, 1, 1], [], []>} : vector<8x32xf32>, vector<32x8xf32>, vector<8x8xf32> -> vector<8x8xf32>
    %c0_6 = arith.constant 0 : index
    %c0_7 = arith.constant 0 : index
    %c0_8 = arith.constant 0 : index
    %c0_9 = arith.constant 0 : index
    %5 = vector.load %arg4[%c0_6, %c0_7, %c0_8, %c0_9] : memref<3x1x1x8xf32, #tpu.memory_space<vmem>>, vector<1x1x1x8xf32>
    %6 = vector.shape_cast %5 : vector<1x1x1x8xf32> to vector<1x8xf32>
    %7 = vector.broadcast %6 : vector<1x8xf32> to vector<8x8xf32>
    %8 = arith.addf %4, %7 : vector<8x8xf32>
    %c1 = arith.constant 1 : index
    %c0_10 = arith.constant 0 : index
    %c0_11 = arith.constant 0 : index
    %c0_12 = arith.constant 0 : index
    %9 = vector.load %arg3[%c1, %c0_10, %c0_11, %c0_12] : memref<3x1x32x8xf32, #tpu.memory_space<vmem>>, vector<1x1x32x8xf32>
    %10 = vector.shape_cast %9 : vector<1x1x32x8xf32> to vector<32x8xf32>
    %cst_13 = arith.constant dense<0.000000e+00> : vector<8x8xf32>
    %11 = tpu.matmul %1, %10, %cst_13 {dimension_numbers = #tpu.dot_dimension_numbers<[1], [0], [0], [1], [0, 0, 1, 1], [], []>} : vector<8x32xf32>, vector<32x8xf32>, vector<8x8xf32> -> vector<8x8xf32>
    %c1_14 = arith.constant 1 : index
    %c0_15 = arith.constant 0 : index
    %c0_16 = arith.constant 0 : index
    %c0_17 = arith.constant 0 : index
    %12 = vector.load %arg4[%c1_14, %c0_15, %c0_16, %c0_17] : memref<3x1x1x8xf32, #tpu.memory_space<vmem>>, vector<1x1x1x8xf32>
    %13 = vector.shape_cast %12 : vector<1x1x1x8xf32> to vector<1x8xf32>
    %14 = vector.broadcast %13 : vector<1x8xf32> to vector<8x8xf32>
    %15 = arith.addf %11, %14 : vector<8x8xf32>
    %c2 = arith.constant 2 : index
    %c0_18 = arith.constant 0 : index
    %c0_19 = arith.constant 0 : index
    %c0_20 = arith.constant 0 : index
    %16 = vector.load %arg3[%c2, %c0_18, %c0_19, %c0_20] : memref<3x1x32x8xf32, #tpu.memory_space<vmem>>, vector<1x1x32x8xf32>
    %17 = vector.shape_cast %16 : vector<1x1x32x8xf32> to vector<32x8xf32>
    %cst_21 = arith.constant dense<0.000000e+00> : vector<8x8xf32>
    %18 = tpu.matmul %1, %17, %cst_21 {dimension_numbers = #tpu.dot_dimension_numbers<[1], [0], [0], [1], [0, 0, 1, 1], [], []>} : vector<8x32xf32>, vector<32x8xf32>, vector<8x8xf32> -> vector<8x8xf32>
    %c2_22 = arith.constant 2 : index
    %c0_23 = arith.constant 0 : index
    %c0_24 = arith.constant 0 : index
    %c0_25 = arith.constant 0 : index
    %19 = vector.load %arg4[%c2_22, %c0_23, %c0_24, %c0_25] : memref<3x1x1x8xf32, #tpu.memory_space<vmem>>, vector<1x1x1x8xf32>
    %20 = vector.shape_cast %19 : vector<1x1x1x8xf32> to vector<1x8xf32>
    %21 = vector.broadcast %20 : vector<1x8xf32> to vector<8x8xf32>
    %22 = arith.addf %18, %21 : vector<8x8xf32>
    %cst_26 = arith.constant dense<0.000000e+00> : vector<8x8xf32>
    %23 = tpu.matmul %8, %15, %cst_26 {dimension_numbers = #tpu.dot_dimension_numbers<[1], [1], [0], [0], [0, 0, 1, 0], [], []>} : vector<8x8xf32>, vector<8x8xf32>, vector<8x8xf32> -> vector<8x8xf32>
    %cst_27 = arith.constant dense<0xFF800000> : vector<8xf32>
    %24 = vector.multi_reduction <maximumf>, %23, %cst_27 [1] : vector<8x8xf32> to vector<8xf32>
    %25 = vector.shape_cast %24 : vector<8xf32> to vector<8x1xf32>
    %26 = vector.broadcast %25 : vector<8x1xf32> to vector<8x8xf32>
    %27 = arith.subf %23, %26 : vector<8x8xf32>
    %28 = math.exp %27 : vector<8x8xf32>
    %cst_28 = arith.constant dense<0.000000e+00> : vector<8xf32>
    %29 = vector.multi_reduction <add>, %28, %cst_28 [1] : vector<8x8xf32> to vector<8xf32>
    %30 = vector.shape_cast %29 : vector<8xf32> to vector<8x1xf32>
    %31 = tpu.reciprocal %30 {approx = true} : vector<8x1xf32> -> vector<8x1xf32>
    %32 = vector.broadcast %31 : vector<8x1xf32> to vector<8x8xf32>
    %33 = arith.mulf %28, %32 : vector<8x8xf32>
    %cst_29 = arith.constant dense<0.000000e+00> : vector<8x8xf32>
    %34 = tpu.matmul %33, %22, %cst_29 {dimension_numbers = #tpu.dot_dimension_numbers<[1], [0], [0], [1], [0, 0, 1, 1], [], []>} : vector<8x8xf32>, vector<8x8xf32>, vector<8x8xf32> -> vector<8x8xf32>
    %c0_30 = arith.constant 0 : index
    %c0_31 = arith.constant 0 : index
    %c0_32 = arith.constant 0 : index
    %c0_33 = arith.constant 0 : index
    %35 = vector.load %arg5[%c0_30, %c0_31, %c0_32, %c0_33] : memref<1x1x8x8xf32, #tpu.memory_space<vmem>>, vector<1x1x8x8xf32>
    %36 = vector.shape_cast %35 : vector<1x1x8x8xf32> to vector<8x8xf32>
    %37 = vector.shape_cast %34 : vector<8x8xf32> to vector<1x1x8x8xf32>
    tpu.vector_store %arg5[%c0_30, %c0_31, %c0_32, %c0_33], %37 {strides = array<i32>} : memref<1x1x8x8xf32, #tpu.memory_space<vmem>>, vector<1x1x8x8xf32>,
    return
  }
  func.func @transform_0(%arg0: i32, %arg1: i32) -> (i32, i32, i32) {
    %c0_i32 = arith.constant 0 : i32
    %c0_i32_0 = arith.constant 0 : i32
    %c0_i32_1 = arith.constant 0 : i32
    return %arg0, %c0_i32, %c0_i32_0 : i32, i32, i32
  }
  func.func @transform_1(%arg0: i32, %arg1: i32) -> (i32, i32, i32, i32) {
    %c0_i32 = arith.constant 0 : i32
    %c0_i32_0 = arith.constant 0 : i32
    %c0_i32_1 = arith.constant 0 : i32
    %c0_i32_2 = arith.constant 0 : i32
    return %c0_i32, %arg1, %c0_i32_0, %c0_i32_1 : i32, i32, i32, i32
  }
  func.func @transform_2(%arg0: i32, %arg1: i32) -> (i32, i32, i32, i32) {
    %c0_i32 = arith.constant 0 : i32
    %c0_i32_0 = arith.constant 0 : i32
    %c0_i32_1 = arith.constant 0 : i32
    %c0_i32_2 = arith.constant 0 : i32
    return %c0_i32, %arg1, %c0_i32_0, %c0_i32_1 : i32, i32, i32, i32
  }
  func.func @transform_3(%arg0: i32, %arg1: i32) -> (i32, i32, i32, i32) {
    %c0_i32 = arith.constant 0 : i32
    %c0_i32_0 = arith.constant 0 : i32
    %c0_i32_1 = arith.constant 0 : i32
    return %arg0, %arg1, %c0_i32, %c0_i32_0 : i32, i32, i32, i32
  }
}

</mosaic_0001>

<llo_original>
// kernel: tpu_custom_call.1
$region0: #{tpu_custom_call.1}
  #allocation0 [shape = 'u32[]', space=smem, size = 0x4, offset = 0x4, fixed_abs, tag = 'smem constant byte address 0x4 - core index']
  #allocation1 [shape = 'u32[72,128]{1,0:T(1,128)}', space=vmem, size = 0x9000, scoped, tag = 'internal scratch']
  %s0 = inlined_call_operand.vmem [shape: f32[2,8,32], index: 0, kind: input, shape index: {}]
  %s1 = inlined_call_operand.vmem [shape: f32[3,4,32,8], index: 1, kind: input, shape index: {}]
  %s2 = inlined_call_operand.vmem [shape: f32[3,4,1,8], index: 2, kind: input, shape index: {}]
  %s3 = inlined_call_operand.hbm [shape: f32[2,4,8,8], index: 3, kind: output, shape index: {}]
  %s4 = sld [smem:[#allocation0]]
  $region117: #{tpu_custom_call.1} parent=0
    _
  %s6 = ssub.s32 1, %s4
  %s7 = scalar_select 0, %s6, %s4
  $region1: #{tpu_custom_call.1} parent=0
    #allocation2 [shape = 'u8[98304]{0}', space=vmem, size = 0x18000, scoped, tag = 'input window, operand 1']
    #allocation3 [shape = 'u8[3072]{0}', space=vmem, size = 0xc00, scoped, tag = 'input window, operand 2']
    #allocation4 [shape = 'u8[8192]{0}', space=vmem, size = 0x2000, scoped, tag = 'output window, operand 0']
    #allocation5 [shape = 's32[2]{0}', space=sflag, size = 0x8, scoped, tag = 'scoped memory for tpu_custom_call.1']
    %8 = vsyncpa [#allocation5], 0
    %s9 = scalar_lea.sflag [#allocation5], 1
    %10 = vsyncpa %s9, 0
    loop: start=0, step=1, limit=10
    $region2: #{tpu_custom_call.1} parent=1 // loop_pre_header
      _
    $region3: #{tpu_custom_call.1} parent=1 // loop_header
      %s12 = sphi 0, %s16
      %p13 = scmp.ge.s32.totalorder %s12, 10
      %s19 = sphi 0, %s31
      %s20 = sphi 0, %s27
      %s21 = sphi 0, %s19
      %s22 = sphi 0, %s20
      %s23 = sphi 0, %s21
      %s24 = sphi 0, %s22
      %s34 = sphi 0, %s36
      %s37 = sphi 0, %s34
      %s38 = sphi 0, %s37
      %s54 = sphi 0, %s38
      %s60 = sphi 0, %s62
      %s63 = sphi 0, %s60
      %s64 = sphi 0, %s63
      %s80 = sphi 0, %s64
      %s86 = sphi 0, %s88
      %s89 = sphi 0, %s86
      %s90 = sphi 0, %s89
      %s106 = sphi 0, %s90
      %s114 = sphi 0, %s116
      %s117 = sphi 0, %s114
      %s118 = sphi 0, %s117
      %s134 = sphi 0, %s118
    $region4: #{tpu_custom_call.1} parent=1 // loop_header_branch
      %15 = sbr.rel (%p13) target = $region8
    $region5: #{tpu_custom_call.1} parent=1 // loop_body
      %s17 = ssub.s32 %s12, 1
      %s18 = ssub.s32 %s12, 2
      %s25 = sadd.s32 1, %s20
      %p26 = scmp.ge.s32.totalorder %s25, 4
      %s27 = scalar_select %p26, 0, %s25
      %s28 = sadd.s32 1, %s19
      %s29 = scalar_select %p26, %s28, %s19
      %p30 = scmp.ge.s32.totalorder %s29, 2
      %s31 = scalar_select %p30, 0, %s29
      %s32 = ssub.s32 %s19, %s31
      %p33 = scmp.eq.s32.totalorder %s32, 0
      %s35 = sadd.s32 %s34, 1
      %s36 = scalar_select %p33, %s34, %s35
      %p39 = pneg %p33
      %p40 = scmp.eq.s32.totalorder %s12, 7
      %p41 = por %p39, %p40
      %p42 = scmp.ne.s32.totalorder %s34, %s37
      %p43 = scmp.eq.s32.totalorder %s12, 0
      %p44 = por %p42, %p43
      %p45 = scmp.ne.s32.totalorder %s34, %s37
      %p46 = scmp.eq.s32.totalorder %s17, 7
      %p47 = por %p45, %p46
      %p48 = scmp.ne.s32.totalorder %s37, %s38
      %p49 = scmp.eq.s32.totalorder %s17, 0
      %p50 = por %p48, %p49
      %p51 = scmp.ne.s32.totalorder %s37, %s38
      %p52 = scmp.eq.s32.totalorder %s18, 7
      %p53 = por %p51, %p52
      %p55 = scmp.ne.s32.totalorder %s38, %s54
      %p56 = scmp.eq.s32.totalorder %s18, 0
      %p57 = por %p55, %p56
      %s58 = ssub.s32 %s20, %s27
      %p59 = scmp.eq.s32.totalorder %s58, 0
      %s61 = sadd.s32 %s60, 1
      %s62 = scalar_select %p59, %s60, %s61
      %p65 = pneg %p59
      %p66 = scmp.eq.s32.totalorder %s12, 7
      %p67 = por %p65, %p66
      %p68 = scmp.ne.s32.totalorder %s60, %s63
      %p69 = scmp.eq.s32.totalorder %s12, 0
      %p70 = por %p68, %p69
      %p71 = scmp.ne.s32.totalorder %s60, %s63
      %p72 = scmp.eq.s32.totalorder %s17, 7
      %p73 = por %p71, %p72
      %p74 = scmp.ne.s32.totalorder %s63, %s64
      %p75 = scmp.eq.s32.totalorder %s17, 0
      %p76 = por %p74, %p75
      %p77 = scmp.ne.s32.totalorder %s63, %s64
      %p78 = scmp.eq.s32.totalorder %s18, 7
      %p79 = por %p77, %p78
      %p81 = scmp.ne.s32.totalorder %s64, %s80
      %p82 = scmp.eq.s32.totalorder %s18, 0
      %p83 = por %p81, %p82
      %s84 = ssub.s32 %s20, %s27
      %p85 = scmp.eq.s32.totalorder %s84, 0
      %s87 = sadd.s32 %s86, 1
      %s88 = scalar_select %p85, %s86, %s87
      %p91 = pneg %p85
      %p92 = scmp.eq.s32.totalorder %s12, 7
      %p93 = por %p91, %p92
      %p94 = scmp.ne.s32.totalorder %s86, %s89
      %p95 = scmp.eq.s32.totalorder %s12, 0
      %p96 = por %p94, %p95
      %p97 = scmp.ne.s32.totalorder %s86, %s89
      %p98 = scmp.eq.s32.totalorder %s17, 7
      %p99 = por %p97, %p98
      %p100 = scmp.ne.s32.totalorder %s89, %s90
      %p101 = scmp.eq.s32.totalorder %s17, 0
      %p102 = por %p100, %p101
      %p103 = scmp.ne.s32.totalorder %s89, %s90
      %p104 = scmp.eq.s32.totalorder %s18, 7
      %p105 = por %p103, %p104
      %p107 = scmp.ne.s32.totalorder %s90, %s106
      %p108 = scmp.eq.s32.totalorder %s18, 0
      %p109 = por %p107, %p108
      %s110 = ssub.s32 %s19, %s31
      %s111 = ssub.s32 %s20, %s27
      %s112 = sor.u32 %s110, %s111
      %p113 = scmp.eq.s32.totalorder %s112, 0
      %s115 = sadd.s32 %s114, 1
      %s116 = scalar_select %p113, %s114, %s115
      %p119 = pneg %p113
      %p120 = scmp.eq.s32.totalorder %s12, 7
      %p121 = por %p119, %p120
      %p122 = scmp.ne.s32.totalorder %s114, %s117
      %p123 = scmp.eq.s32.totalorder %s12, 0
      %p124 = por %p122, %p123
      %p125 = scmp.ne.s32.totalorder %s114, %s117
      %p126 = scmp.eq.s32.totalorder %s17, 7
      %p127 = por %p125, %p126
      %p128 = scmp.ne.s32.totalorder %s117, %s118
      %p129 = scmp.eq.s32.totalorder %s17, 0
      %p130 = por %p128, %p129
      %p131 = scmp.ne.s32.totalorder %s117, %s118
      %p132 = scmp.eq.s32.totalorder %s18, 7
      %p133 = por %p131, %p132
      %p135 = scmp.ne.s32.totalorder %s118, %s134
      %p136 = scmp.eq.s32.totalorder %s18, 0
      %p137 = por %p135, %p136
      %p138 = scmp.le.s32.totalorder 1, %s12
      %p139 = scmp.lt.s32.totalorder %s12, 9
      %p140 = pnand %p138, %p139
      %p141 = pneg %p140
      // Predicated region
      $region9: #{tpu_custom_call.1} parent=5 // pred_check
        _
      $region10: #{tpu_custom_call.1} parent=5 // pred_check_branch
        %143 = sbr.rel (%p140) target = $region12
      $region11: #{tpu_custom_call.1} parent=5 // pred_region
        %s144 = ssub.s32 %s12, 1
      $region12: #{tpu_custom_call.1} parent=5 // pred_fallthru
        _
      %p145 = scmp.lt.s32.totalorder %s12, 8
      // Predicated region
      $region13: #{tpu_custom_call.1} parent=5 // pred_check
        %p146 = pneg %p145
      $region14: #{tpu_custom_call.1} parent=5 // pred_check_branch
        %148 = sbr.rel (%p146) target = $region16
      $region15: #{tpu_custom_call.1} parent=5 // pred_region
        // Predicated region
        $region17: #{tpu_custom_call.1} parent=15 // pred_check
          %p149 = pneg %p44
        $region18: #{tpu_custom_call.1} parent=15 // pred_check_branch
          %151 = sbr.rel (%p149) target = $region20
        $region19: #{tpu_custom_call.1} parent=15 // pred_region
          %p152 = scmp.lt.s32.totalorder %s19, 1
          %s153 = scalar_select %p152, %s19, 1
          %s154 = smul.addr %s153, 8
          %s155 = scalar_lea.vmem %s0, %s154
        $region20: #{tpu_custom_call.1} parent=15 // pred_fallthru
          _
        // Predicated region
        $region21: #{tpu_custom_call.1} parent=15 // pred_check
          %p156 = pneg %p70
        $region22: #{tpu_custom_call.1} parent=15 // pred_check_branch
          %158 = sbr.rel (%p156) target = $region24
        $region23: #{tpu_custom_call.1} parent=15 // pred_region
          %s159 = sand.u32 %s60, 1
          %s160 = sand.u32 %s60, 1
          %s161 = smul.addr %s160, 96
          %s162 = scalar_lea.vmem [#allocation2], %s161
          %s163 = smul.addr %s20, 4
          %s164 = smul.addr %s163, 8
          %s165 = scalar_lea.vmem %s1, %s164
          // Predicated region
          $region25: #{tpu_custom_call.1} parent=23 // pred_check
            _
          $region26: #{tpu_custom_call.1} parent=23 // pred_check_branch
            %167 = sbr.rel (0) target = $region28
          $region27: #{tpu_custom_call.1} parent=23 // pred_region
            // Predicated region
            $region29: #{tpu_custom_call.1} parent=27 // pred_check
              _
            $region30: #{tpu_custom_call.1} parent=27 // pred_check_branch
              %169 = sbr.rel (0) target = $region32
            $region31: #{tpu_custom_call.1} parent=27 // pred_region
              // Predicated region
              $region44: #{tpu_custom_call.1} parent=31 // pred_check
                _
              $region45: #{tpu_custom_call.1} parent=31 // pred_check_branch
                %207 = sbr.rel (0) target = $region47
              $region46: #{tpu_custom_call.1} parent=31 // pred_region
                loop: start=0, step=1, limit=1
                $region48: #{tpu_custom_call.1} parent=46 // loop_pre_header
                  _
                $region49: #{tpu_custom_call.1} parent=46 // loop_header
                  %s209 = sphi 0, %s213
                  %p210 = scmp.ge.s32.totalorder %s209, 1
                  %s214 = sphi %s165, %s165
                  %s215 = sphi %s162, %s162
                $region50: #{tpu_custom_call.1} parent=46 // loop_header_branch
                  %212 = sbr.rel (%p210) target = $region54
                $region51: #{tpu_custom_call.1} parent=46 // loop_body
                  %v216 = vld [vmem:[%s214] sm:$0xff]
                  %217 = vst [vmem:[%s215] sm:$0xff] %v216
                  %v218 = vld [vmem:[%s214 + $0x8] sm:$0xff]
                  %219 = vst [vmem:[%s215 + $0x8] sm:$0xff] %v218
                  %v220 = vld [vmem:[%s214 + $0x10] sm:$0xff]
                  %221 = vst [vmem:[%s215 + $0x10] sm:$0xff] %v220
                  %v222 = vld [vmem:[%s214 + $0x18] sm:$0xff]
                  %223 = vst [vmem:[%s215 + $0x18] sm:$0xff] %v222
                  %v224 = vld [vmem:[%s214 + $0x80] sm:$0xff]
                  %225 = vst [vmem:[%s215 + $0x20] sm:$0xff] %v224
                  %v226 = vld [vmem:[%s214 + $0x88] sm:$0xff]
                  %227 = vst [vmem:[%s215 + $0x28] sm:$0xff] %v226
                  %v228 = vld [vmem:[%s214 + $0x90] sm:$0xff]
                  %229 = vst [vmem:[%s215 + $0x30] sm:$0xff] %v228
                  %v230 = vld [vmem:[%s214 + $0x98] sm:$0xff]
                  %231 = vst [vmem:[%s215 + $0x38] sm:$0xff] %v230
                  %v232 = vld [vmem:[%s214 + $0x100] sm:$0xff]
                  %233 = vst [vmem:[%s215 + $0x40] sm:$0xff] %v232
                  %v234 = vld [vmem:[%s214 + $0x108] sm:$0xff]
                  %235 = vst [vmem:[%s215 + $0x48] sm:$0xff] %v234
                  %v236 = vld [vmem:[%s214 + $0x110] sm:$0xff]
                  %237 = vst [vmem:[%s215 + $0x50] sm:$0xff] %v236
                  %v238 = vld [vmem:[%s214 + $0x118] sm:$0xff]
                  %239 = vst [vmem:[%s215 + $0x58] sm:$0xff] %v238
                $region52: #{tpu_custom_call.1} parent=46 // loop_footer
                  %s213 = sadd.s32 1, %s209
                $region53: #{tpu_custom_call.1} parent=46 // loop_footer_branch
                  %208 = sbr.rel target = $region49
                $region54: #{tpu_custom_call.1} parent=46 // loop_exit
                  _
              $region47: #{tpu_custom_call.1} parent=31 // pred_fallthru
                _
              // Predicated region
              $region55: #{tpu_custom_call.1} parent=31 // pred_check
                _
              $region56: #{tpu_custom_call.1} parent=31 // pred_check_branch
                %241 = sbr.rel target = $region58
              $region57: #{tpu_custom_call.1} parent=31 // pred_region
                _
              $region58: #{tpu_custom_call.1} parent=31 // pred_fallthru
                _
            $region32: #{tpu_custom_call.1} parent=27 // pred_fallthru
              _
            // Predicated region
            $region33: #{tpu_custom_call.1} parent=27 // pred_check
              _
            $region34: #{tpu_custom_call.1} parent=27 // pred_check_branch
              %171 = sbr.rel target = $region36
            $region35: #{tpu_custom_call.1} parent=27 // pred_region
              %s173 = ssub.s32 256, 1
              loop: start=0, step=1, limit=1
              $region37: #{tpu_custom_call.1} parent=35 // loop_pre_header
                _
              $region38: #{tpu_custom_call.1} parent=35 // loop_header
                %s175 = sphi 0, %s179
                %p176 = scmp.ge.s32.totalorder %s175, 1
                %s180 = sphi %s165, %s165
                %s181 = sphi %s162, %s162
              $region39: #{tpu_custom_call.1} parent=35 // loop_header_branch
                %178 = sbr.rel (%p176) target = $region43
              $region40: #{tpu_custom_call.1} parent=35 // loop_body
                %v182 = vld [vmem:[%s180] sm:%s173]
                %183 = vst [vmem:[%s181] sm:%s173] %v182
                %v184 = vld [vmem:[%s180 + $0x8] sm:%s173]
                %185 = vst [vmem:[%s181 + $0x8] sm:%s173] %v184
                %v186 = vld [vmem:[%s180 + $0x10] sm:%s173]
                %187 = vst [vmem:[%s181 + $0x10] sm:%s173] %v186
                %v188 = vld [vmem:[%s180 + $0x18] sm:%s173]
                %189 = vst [vmem:[%s181 + $0x18] sm:%s173] %v188
                %v190 = vld [vmem:[%s180 + $0x80] sm:%s173]
                %191 = vst [vmem:[%s181 + $0x20] sm:%s173] %v190
                %v192 = vld [vmem:[%s180 + $0x88] sm:%s173]
                %193 = vst [vmem:[%s181 + $0x28] sm:%s173] %v192
                %v194 = vld [vmem:[%s180 + $0x90] sm:%s173]
                %195 = vst [vmem:[%s181 + $0x30] sm:%s173] %v194
                %v196 = vld [vmem:[%s180 + $0x98] sm:%s173]
                %197 = vst [vmem:[%s181 + $0x38] sm:%s173] %v196
                %v198 = vld [vmem:[%s180 + $0x100] sm:%s173]
                %199 = vst [vmem:[%s181 + $0x40] sm:%s173] %v198
                %v200 = vld [vmem:[%s180 + $0x108] sm:%s173]
                %201 = vst [vmem:[%s181 + $0x48] sm:%s173] %v200
                %v202 = vld [vmem:[%s180 + $0x110] sm:%s173]
                %203 = vst [vmem:[%s181 + $0x50] sm:%s173] %v202
                %v204 = vld [vmem:[%s180 + $0x118] sm:%s173]
                %205 = vst [vmem:[%s181 + $0x58] sm:%s173] %v204
              $region41: #{tpu_custom_call.1} parent=35 // loop_footer
                %s179 = sadd.s32 1, %s175
              $region42: #{tpu_custom_call.1} parent=35 // loop_footer_branch
                %174 = sbr.rel target = $region38
              $region43: #{tpu_custom_call.1} parent=35 // loop_exit
                _
            $region36: #{tpu_custom_call.1} parent=27 // pred_fallthru
              _
          $region28: #{tpu_custom_call.1} parent=23 // pred_fallthru
            _
          %242 = vnop
        $region24: #{tpu_custom_call.1} parent=15 // pred_fallthru
          _
        // Predicated region
        $region59: #{tpu_custom_call.1} parent=15 // pred_check
          %p243 = pneg %p96
        $region60: #{tpu_custom_call.1} parent=15 // pred_check_branch
          %245 = sbr.rel (%p243) target = $region62
        $region61: #{tpu_custom_call.1} parent=15 // pred_region
          %s246 = sand.u32 %s86, 1
          %s247 = sand.u32 %s86, 1
          %s248 = smul.addr %s247, 3
          %s249 = scalar_lea.vmem [#allocation3], %s248
          %s250 = scalar_lea.vmem %s2, %s20
          // Predicated region
          $region63: #{tpu_custom_call.1} parent=61 // pred_check
            _
          $region64: #{tpu_custom_call.1} parent=61 // pred_check_branch
            %252 = sbr.rel (0) target = $region66
          $region65: #{tpu_custom_call.1} parent=61 // pred_region
            // Predicated region
            $region67: #{tpu_custom_call.1} parent=65 // pred_check
              _
            $region68: #{tpu_custom_call.1} parent=65 // pred_check_branch
              %254 = sbr.rel target = $region70
            $region69: #{tpu_custom_call.1} parent=65 // pred_region
              // Predicated region
              $region82: #{tpu_custom_call.1} parent=69 // pred_check
                _
              $region83: #{tpu_custom_call.1} parent=69 // pred_check_branch
                %274 = sbr.rel (0) target = $region85
              $region84: #{tpu_custom_call.1} parent=69 // pred_region
                %s276 = ssub.s32 2, 1
                loop: start=0, step=1, limit=1
                $region86: #{tpu_custom_call.1} parent=84 // loop_pre_header
                  _
                $region87: #{tpu_custom_call.1} parent=84 // loop_header
                  %s278 = sphi 0, %s282
                  %p279 = scmp.ge.s32.totalorder %s278, 1
                  %s283 = sphi %s250, %s250
                  %s284 = sphi %s249, %s249
                $region88: #{tpu_custom_call.1} parent=84 // loop_header_branch
                  %281 = sbr.rel (%p279) target = $region92
                $region89: #{tpu_custom_call.1} parent=84 // loop_body
                  %v285 = vld [vmem:[%s283] sm:%s276]
                  %286 = vst [vmem:[%s284] sm:%s276] %v285
                  %v287 = vld [vmem:[%s283 + $0x4] sm:%s276]
                  %288 = vst [vmem:[%s284 + $0x1] sm:%s276] %v287
                  %v289 = vld [vmem:[%s283 + $0x8] sm:%s276]
                  %290 = vst [vmem:[%s284 + $0x2] sm:%s276] %v289
                $region90: #{tpu_custom_call.1} parent=84 // loop_footer
                  %s282 = sadd.s32 1, %s278
                $region91: #{tpu_custom_call.1} parent=84 // loop_footer_branch
                  %277 = sbr.rel target = $region87
                $region92: #{tpu_custom_call.1} parent=84 // loop_exit
                  _
              $region85: #{tpu_custom_call.1} parent=69 // pred_fallthru
                _
            $region70: #{tpu_custom_call.1} parent=65 // pred_fallthru
              _
            // Predicated region
            $region71: #{tpu_custom_call.1} parent=65 // pred_check
              _
            $region72: #{tpu_custom_call.1} parent=65 // pred_check_branch
              %256 = sbr.rel (0) target = $region74
            $region73: #{tpu_custom_call.1} parent=65 // pred_region
              %s258 = ssub.s32 2, 1
              loop: start=0, step=1, limit=1
              $region75: #{tpu_custom_call.1} parent=73 // loop_pre_header
                _
              $region76: #{tpu_custom_call.1} parent=73 // loop_header
                %s260 = sphi 0, %s264
                %p261 = scmp.ge.s32.totalorder %s260, 1
                %s265 = sphi %s250, %s250
                %s266 = sphi %s249, %s249
              $region77: #{tpu_custom_call.1} parent=73 // loop_header_branch
                %263 = sbr.rel (%p261) target = $region81
              $region78: #{tpu_custom_call.1} parent=73 // loop_body
                %v267 = vld [vmem:[%s265] sm:%s258]
                %268 = vst [vmem:[%s266] sm:%s258] %v267
                %v269 = vld [vmem:[%s265 + $0x4] sm:%s258]
                %270 = vst [vmem:[%s266 + $0x1] sm:%s258] %v269
                %v271 = vld [vmem:[%s265 + $0x8] sm:%s258]
                %272 = vst [vmem:[%s266 + $0x2] sm:%s258] %v271
              $region79: #{tpu_custom_call.1} parent=73 // loop_footer
                %s264 = sadd.s32 1, %s260
              $region80: #{tpu_custom_call.1} parent=73 // loop_footer_branch
                %259 = sbr.rel target = $region76
              $region81: #{tpu_custom_call.1} parent=73 // loop_exit
                _
            $region74: #{tpu_custom_call.1} parent=65 // pred_fallthru
              _
          $region66: #{tpu_custom_call.1} parent=61 // pred_fallthru
            _
          %291 = vnop
        $region62: #{tpu_custom_call.1} parent=15 // pred_fallthru
          _
      $region16: #{tpu_custom_call.1} parent=5 // pred_fallthru
        _
      %p292 = scmp.le.s32.totalorder 1, %s12
      %p293 = scmp.lt.s32.totalorder %s12, 9
      %p294 = pnand %p292, %p293
      %p295 = pneg %p294
      // Predicated region
      $region93: #{tpu_custom_call.1} parent=5 // pred_check
        _
      $region94: #{tpu_custom_call.1} parent=5 // pred_check_branch
        %297 = sbr.rel (%p294) target = $region96
      $region95: #{tpu_custom_call.1} parent=5 // pred_region
        %s298 = ssub.s32 %s12, 1
        %s299 = sand.u32 %s63, 1
        %s300 = sand.u32 %s63, 1
        %s301 = smul.addr %s300, 96
        %s302 = scalar_lea.vmem [#allocation2], %s301
        // Predicated region
        $region97: #{tpu_custom_call.1} parent=95 // pred_check
          %p303 = pneg %p76
        $region98: #{tpu_custom_call.1} parent=95 // pred_check_branch
          %305 = sbr.rel (%p303) target = $region100
        $region99: #{tpu_custom_call.1} parent=95 // pred_region
          _
        $region100: #{tpu_custom_call.1} parent=95 // pred_fallthru
          _
        %s306 = sand.u32 %s89, 1
        %s307 = sand.u32 %s89, 1
        %s308 = smul.addr %s307, 3
        %s309 = scalar_lea.vmem [#allocation3], %s308
        // Predicated region
        $region101: #{tpu_custom_call.1} parent=95 // pred_check
          %p310 = pneg %p102
        $region102: #{tpu_custom_call.1} parent=95 // pred_check_branch
          %312 = sbr.rel (%p310) target = $region104
        $region103: #{tpu_custom_call.1} parent=95 // pred_region
          _
        $region104: #{tpu_custom_call.1} parent=95 // pred_fallthru
          _
        %p313 = scmp.lt.s32.totalorder %s21, 1
        %s314 = scalar_select %p313, %s21, 1
        %s315 = smul.addr %s314, 8
        %s316 = scalar_lea.vmem %s0, %s315
        %p317 = pneg %p50
        %p318 = pneg %p47
        %s319 = sand.u32 %s63, 1
        %s320 = sand.u32 %s63, 1
        %s321 = smul.addr %s320, 96
        %s322 = scalar_lea.vmem [#allocation2], %s321
        %p323 = pneg %p76
        %p324 = pneg %p73
        %s325 = sand.u32 %s89, 1
        %s326 = sand.u32 %s89, 1
        %s327 = smul.addr %s326, 3
        %s328 = scalar_lea.vmem [#allocation3], %s327
        %p329 = pneg %p102
        %p330 = pneg %p99
        %p331 = pneg %p130
        %p332 = pneg %p127
        %s333 = sand.u32 %s117, 1
        %s334 = scalar_lea.sflag [#allocation5], %s333
        %s335 = sand.u32 %s117, 1
        %s336 = smul.addr %s335, 8
        %s337 = scalar_lea.vmem [#allocation4], %s336
        %p338 = scmp.lt.s32.totalorder %s21, 1
        %s339 = scalar_select %p338, %s21, 1
        %s340 = smul.addr %s339, 8
        %s341 = scalar_lea.vmem %s0, %s340
        %v342 = vld [vmem:[%s341] sm:$0xff]
        %v343 = vld [vmem:[%s302] sm:$0xff]
        %v344 = vld [vmem:[%s302 + $0x8] sm:$0xff]
        %v345 = vld [vmem:[%s302 + $0x10] sm:$0xff]
        %v346 = vld [vmem:[%s302 + $0x18] sm:$0xff]
        %v347 = vld [vmem:[%s309] sm:$0x1]
        %v349 = vperm.slane %v347, 0
        %vm351 = vcmask 261120
        %v353 = vsel %vm351, %v342, 0
        %355 = vmatpush.msra.mxu0 0.0
        %356 = vmatpush.msra.mxu0 0.0
        %357 = vmatpush.msra.mxu0 0.0
        %358 = vmatpush.msra.mxu0 0.0
        %359 = vmatpush.msra.mxu0 0.0
        %360 = vmatpush.msra.mxu0 0.0
        %361 = vmatpush.msra.mxu0 0.0
        %362 = vmatpush.msra.mxu0 0.0
        %363 = vmatpush.msra.mxu0 0.0
        %364 = vmatpush.msra.mxu0 0.0
        %365 = vmatpush.msra.mxu0 0.0
        %366 = vmatpush.msra.mxu0 0.0
        %367 = vmatpush.msra.mxu0 %v346
        %368 = vmatpush.msra.mxu0 %v345
        %369 = vmatpush.msra.mxu0 %v344
        %370 = vmatpush.msra.mxu0 %v343
        %371 = vmatmul.f32.gmra.mxu0 %v353
        %v372 = vpop.f32.mrf.mxu0
        %v373 = vadd.f32 %v349, %v372
        %374 = vdwg.mxu0
        %s375 = scalar_lea.vmem %s302, 32 [#allocation2]
        %v376 = vld [vmem:[%s375] sm:$0xff]
        %v377 = vld [vmem:[%s375 + $0x8] sm:$0xff]
        %v378 = vld [vmem:[%s375 + $0x10] sm:$0xff]
        %v379 = vld [vmem:[%s375 + $0x18] sm:$0xff]
        %s380 = scalar_lea.vmem %s309, 1 [#allocation3]
        %v381 = vld [vmem:[%s380] sm:$0x1]
        %v383 = vperm.slane %v381, 0
        %385 = vmatpush.msra.mxu0 0.0
        %386 = vmatpush.msra.mxu0 0.0
        %387 = vmatpush.msra.mxu0 0.0
        %388 = vmatpush.msra.mxu0 0.0
        %389 = vmatpush.msra.mxu0 0.0
        %390 = vmatpush.msra.mxu0 0.0
        %391 = vmatpush.msra.mxu0 0.0
        %392 = vmatpush.msra.mxu0 0.0
        %393 = vmatpush.msra.mxu0 0.0
        %394 = vmatpush.msra.mxu0 0.0
        %395 = vmatpush.msra.mxu0 0.0
        %396 = vmatpush.msra.mxu0 0.0
        %397 = vmatpush.msra.mxu0 %v379
        %398 = vmatpush.msra.mxu0 %v378
        %399 = vmatpush.msra.mxu0 %v377
        %400 = vmatpush.msra.mxu0 %v376
        %401 = vmatmul.f32.gmra.mxu0 %v353
        %v402 = vpop.f32.mrf.mxu0
        %v403 = vadd.f32 %v383, %v402
        %404 = vdwg.mxu0
        %s405 = scalar_lea.vmem %s302, 64 [#allocation2]
        %v406 = vld [vmem:[%s405] sm:$0xff]
        %v407 = vld [vmem:[%s405 + $0x8] sm:$0xff]
        %v408 = vld [vmem:[%s405 + $0x10] sm:$0xff]
        %v409 = vld [vmem:[%s405 + $0x18] sm:$0xff]
        %s410 = scalar_lea.vmem %s309, 2 [#allocation3]
        %v411 = vld [vmem:[%s410] sm:$0x1]
        %v413 = vperm.slane %v411, 0
        %415 = vmatpush.msra.mxu0 0.0
        %416 = vmatpush.msra.mxu0 0.0
        %417 = vmatpush.msra.mxu0 0.0
        %418 = vmatpush.msra.mxu0 0.0
        %419 = vmatpush.msra.mxu0 0.0
        %420 = vmatpush.msra.mxu0 0.0
        %421 = vmatpush.msra.mxu0 0.0
        %422 = vmatpush.msra.mxu0 0.0
        %423 = vmatpush.msra.mxu0 0.0
        %424 = vmatpush.msra.mxu0 0.0
        %425 = vmatpush.msra.mxu0 0.0
        %426 = vmatpush.msra.mxu0 0.0
        %427 = vmatpush.msra.mxu0 %v409
        %428 = vmatpush.msra.mxu0 %v408
        %429 = vmatpush.msra.mxu0 %v407
        %430 = vmatpush.msra.mxu0 %v406
        %431 = vmatmul.f32.gmra.mxu0 %v353
        %v432 = vpop.f32.mrf.mxu0
        %v433 = vadd.f32 %v413, %v432
        %434 = vdwg.mxu0
        %vm435 = vcmask 64512
        %v437 = vsel %vm435, %v373, 0
        %v440 = vsel %vm435, %v403, 0
        %442 = vmatpush.xpose.msra.mxu0 0.0
        %443 = vmatpush.xpose.msra.mxu0 0.0
        %444 = vmatpush.xpose.msra.mxu0 0.0
        %445 = vmatpush.xpose.msra.mxu0 0.0
        %446 = vmatpush.xpose.msra.mxu0 0.0
        %447 = vmatpush.xpose.msra.mxu0 0.0
        %448 = vmatpush.xpose.msra.mxu0 0.0
        %449 = vmatpush.xpose.msra.mxu0 0.0
        %450 = vmatpush.xpose.msra.mxu0 0.0
        %451 = vmatpush.xpose.msra.mxu0 0.0
        %452 = vmatpush.xpose.msra.mxu0 0.0
        %453 = vmatpush.xpose.msra.mxu0 0.0
        %454 = vmatpush.xpose.msra.mxu0 0.0
        %455 = vmatpush.xpose.msra.mxu0 0.0
        %456 = vmatpush.xpose.msra.mxu0 0.0
        %457 = vmatpush.xpose.msra.mxu0 %v440
        %458 = vmatmul.f32.gmra.mxu0 %v437
        %v459 = vpop.f32.mrf.mxu0
        %v460 = vadd.f32 0.0, %v459
        %461 = vdwg.mxu0
        %v462 = vsel %vm435, %v460, -inf
        %463 = vmax.xlane.f32.xlu0 %v462
        %v464 = vpop.xlane.xlu0 %463
        %v465 = vsub.f32 %v460, %v464
        %v466 = vmul.f32 %v465, 1.442695
        %v467 = vpow.pop %v466
        %v468 = vsel %vm435, %v467, 0.0
        %469 = vadd.xlane.f32.xlu0 %v468
        %v470 = vpop.xlane.xlu0 %469
        %v471 = vrcp.pop %v470
        %v472 = vmul.f32 %v467, %v471
        %v474 = vsel %vm435, %v472, 0
        %476 = vmatpush.msra.mxu0 0.0
        %477 = vmatpush.msra.mxu0 0.0
        %478 = vmatpush.msra.mxu0 0.0
        %479 = vmatpush.msra.mxu0 0.0
        %480 = vmatpush.msra.mxu0 0.0
        %481 = vmatpush.msra.mxu0 0.0
        %482 = vmatpush.msra.mxu0 0.0
        %483 = vmatpush.msra.mxu0 0.0
        %484 = vmatpush.msra.mxu0 0.0
        %485 = vmatpush.msra.mxu0 0.0
        %486 = vmatpush.msra.mxu0 0.0
        %487 = vmatpush.msra.mxu0 0.0
        %488 = vmatpush.msra.mxu0 0.0
        %489 = vmatpush.msra.mxu0 0.0
        %490 = vmatpush.msra.mxu0 0.0
        %491 = vmatpush.msra.mxu0 %v433
        %492 = vmatmul.f32.gmra.mxu0 %v474
        %v493 = vpop.f32.mrf.mxu0
        %v494 = vadd.f32 0.0, %v493
        %495 = vdwg.mxu0
        %496 = vst.msk [vmem:[%s337] sm:$0xff] %vm435, %v494
        %s497 = sand.u32 %s117, 1
        %s498 = scalar_lea.sflag [#allocation5], %s497
        %s499 = sand.u32 %s117, 1
        %s500 = smul.addr %s499, 8
        %s501 = scalar_lea.vmem [#allocation4], %s500
        // Predicated region
        $region105: #{tpu_custom_call.1} parent=95 // pred_check
          %p502 = pneg %p127
        $region106: #{tpu_custom_call.1} parent=95 // pred_check_branch
          %504 = sbr.rel (%p502) target = $region108
        $region107: #{tpu_custom_call.1} parent=95 // pred_region
          %506 = vsyncadd %s498, 0
          %s507 = smul.addr %s21, 4
          %s508 = sadd.s32 %s22, %s507
          %s509 = smul.addr %s508, 8
          %s510 = scalar_lea.hbm %s3, %s509
          %s512 = sshll.u32 %s501, 4
          %s513 = int_to_ptr.vmem [resolvable:$true] %s512
          %s514 = sshll.u32 %s510, 4
          %s515 = int_to_ptr.hbm [resolvable:$true] %s514
          %517 = dma.vmem_to_hbm [thread:$0]  %s513, 128, %s515, %s498
        $region108: #{tpu_custom_call.1} parent=95 // pred_fallthru
          _
      $region96: #{tpu_custom_call.1} parent=5 // pred_fallthru
        _
      %p518 = scmp.le.s32.totalorder 2, %s12
      // Predicated region
      $region109: #{tpu_custom_call.1} parent=5 // pred_check
        %p519 = pneg %p518
      $region110: #{tpu_custom_call.1} parent=5 // pred_check_branch
        %521 = sbr.rel (%p519) target = $region112
      $region111: #{tpu_custom_call.1} parent=5 // pred_region
        %s522 = ssub.s32 %s12, 2
        // Predicated region
        $region113: #{tpu_custom_call.1} parent=111 // pred_check
          %p523 = pneg %p133
        $region114: #{tpu_custom_call.1} parent=111 // pred_check_branch
          %525 = sbr.rel (%p523) target = $region116
        $region115: #{tpu_custom_call.1} parent=111 // pred_region
          %s526 = sand.u32 %s118, 1
          %s527 = scalar_lea.sflag [#allocation5], %s526
          %s528 = sand.u32 %s118, 1
          %s529 = smul.addr %s528, 8
          %s530 = scalar_lea.vmem [#allocation4], %s529
          %532 = dma.done %s527, 128
        $region116: #{tpu_custom_call.1} parent=111 // pred_fallthru
          _
      $region112: #{tpu_custom_call.1} parent=5 // pred_fallthru
        _
    $region6: #{tpu_custom_call.1} parent=1 // loop_footer
      %s16 = sadd.s32 1, %s12
    $region7: #{tpu_custom_call.1} parent=1 // loop_footer_branch
      %11 = sbr.rel target = $region3
    $region8: #{tpu_custom_call.1} parent=1 // loop_exit
      _
    %533 = vsyncpa [#allocation5], 1
    %s534 = scalar_lea.sflag [#allocation5], 1
    %535 = vsyncpa %s534, 1

</llo_original>
